<compile_context>
chip_gen: v7x
topology: tpu7x:2x2x1
jax: 0.10.0
libtpu: 0.0.40
codegen_flags: <defaults>
</compile_context>

<pallas_src>
import functools

import jax
import jax.numpy as jnp
from jax.experimental import pallas as pl
from jax.experimental.pallas import tpu as pltpu


# ---------------------------------------------------------------------------
# Generation-aware VMEM limits / tile budget
# ---------------------------------------------------------------------------
def _vmem_limits():
    cap = 64 * 1024 * 1024  # conservative default = v7x per-TC physical VMEM
    try:
        info = pltpu.get_tpu_info()
        cap = int(getattr(info, "vmem_capacity_bytes", cap))
    except Exception:
        pass
    # Scoped limit: ~3/4 of physical, never above 64 MiB.
    #   v5e/v6e (128 MiB) -> 64 MiB limit, ~21 MiB block budget
    #   v7x    ( 64 MiB) -> 48 MiB limit, ~16 MiB block budget
    vmem_limit = min((cap * 3) // 4, 64 * 1024 * 1024)
    budget = vmem_limit // 3
    return vmem_limit, budget


def _pick_channel_tile(bs, ch, hw, itemsize, budget_bytes):
    """Channel tile sized against an honest per-element VMEM estimate:
    double-buffered input + output (4*itemsize) plus ~3 full-tile f32 temps
    (x.astype(f32) / centered / pre-cast result) at peak."""
    bytes_per_row = hw * (4 * itemsize + 12)
    sub = {1: 32, 2: 16}.get(itemsize, 8)  # dtype-aware sublane multiple
    tc = int(budget_bytes // max(bytes_per_row, 1))
    if bs < 2:
        # Guarantee >= 2 parallel grid steps so both v7x TensorCores get work.
        tc = min(tc, (ch + 1) // 2)
    if tc >= ch:
        return ch  # full-channel block (== array dim, always legal)
    # TODO(synk): add an HW-tiling fallback (per-channel sum / sum-of-squares
    # accumulators over an "arbitrary" trailing HW grid axis) for layers with
    # very few channels and huge H*W, where even a minimal channel tile can
    # exceed the budget and the grid degenerates to 1-2 un-pipelined steps.
    tc = max(sub, (tc // sub) * sub)
    return min(tc, ch)


# ---------------------------------------------------------------------------
# Kernel 1: style projection (single MXU dot) + per-channel style stats.
#   Wg2[f, j*ch + c] = W[4*c + j, f]   (pre-arranged once in __init__)
#   proj[b, j*ch + c] = (y_flat @ W^T + b)[b, 4*c + j]
# ---------------------------------------------------------------------------
def style_stats_kernel(y_ref, w_ref, b_ref, mean_ref, std_ref, *, ch, eps):
    y = y_ref[...]  # (bs, F) f32
    # One small matmul; f32-exact (HIGHEST) because it feeds the per-channel
    # affine of every output element and its cost is negligible.
    proj = (
        jnp.dot(
            y,
            w_ref[...],
            preferred_element_type=jnp.float32,
            precision=jax.lax.Precision.HIGHEST,
        )
        + b_ref[...]
    )  # (bs, 4*ch)
    p0 = proj[:, 0 * ch:1 * ch]
    p1 = proj[:, 1 * ch:2 * ch]
    p2 = proj[:, 2 * ch:3 * ch]
    p3 = proj[:, 3 * ch:4 * ch]
    y_mean = (p0 + p1 + p2 + p3) * 0.25
    # unbiased variance over the 4 values per channel (torch.var default, N-1=3)
    y_var = (
        (p0 - y_mean) ** 2
        + (p1 - y_mean) ** 2
        + (p2 - y_mean) ** 2
        + (p3 - y_mean) ** 2
    ) * (1.0 / 3.0)
    mean_ref[...] = y_mean
    std_ref[...] = jnp.sqrt(y_var + eps)


def _style_stats_xla(y_flat, W, b, eps):
    """Plain-XLA fallback for latent sizes whose weights do not fit VMEM."""
    proj = jnp.dot(y_flat, W.T, precision=jax.lax.Precision.HIGHEST) + b
    p = proj.reshape(y_flat.shape[0], -1, 4)  # (bs, ch, 4)
    y_mean = jnp.mean(p, axis=-1)
    y_var = jnp.var(p, axis=-1, ddof=1)
    return y_mean, jnp.sqrt(y_var + eps)


# ---------------------------------------------------------------------------
# Kernel 2: per-(batch, channel-tile) normalization + affine.
#   out = centered * scale + y_mean,   scale = y_std * rsqrt(x_var + eps)
# ---------------------------------------------------------------------------
def adain_norm_kernel(x_ref, stats_ref, o_ref, *, eps):
    x = x_ref[...].astype(jnp.float32)  # (1, TC, HW)
    hw = x.shape[-1]

    x_mean = jnp.mean(x, axis=-1, keepdims=True)  # (1, TC, 1)
    centered = x - x_mean                         # reused by the epilogue
    # unbiased variance (divide by HW-1), like torch.var default
    x_var = jnp.sum(centered * centered, axis=-1, keepdims=True) * (
        1.0 / max(hw - 1, 1)
    )
    inv_std = jax.lax.rsqrt(x_var + eps)          # EUP

    stats = stats_ref[...]                        # (1, TC, 2) f32, packed stats
    y_mean = stats[:, :, 0:1]                     # (1, TC, 1)
    y_std = stats[:, :, 1:2]                      # (1, TC, 1)

    scale = y_std * inv_std                       # (1, TC, 1)
    # x is no longer live here: only `centered` is carried into the epilogue.
    o_ref[...] = (centered * scale + y_mean).astype(o_ref.dtype)


# ---------------------------------------------------------------------------
# Module wrapper
# ---------------------------------------------------------------------------
class AdaINPallas:
    def __init__(self, in_channel, latent_shape, eps=1e-5, key=None):
        self.in_channel = in_channel
        self.latent_shape = latent_shape
        self.eps = eps
        self.flatten_dim = latent_shape[0] * latent_shape[1] * latent_shape[2]
        out_dim = in_channel * 4
        if key is None:
            key = jax.random.PRNGKey(42)
        kw, kb = jax.random.split(key)
        # Deterministic init mimicking nn.Linear default: U(-1/sqrt(F), 1/sqrt(F))
        bound = 1.0 / (self.flatten_dim ** 0.5)
        # Canonical torch-layout parameters (used by the pure-JAX reference).
        self.W = jax.random.uniform(
            kw, (out_dim, self.flatten_dim), jnp.float32, -bound, bound
        )
        self.b = jax.random.uniform(kb, (out_dim,), jnp.float32, -bound, bound)
        # One-time re-layout for the kernel (no per-call transpose):
        #   Wg2[f, j*ch + c] = W[4*c + j, f],   bg2[0, j*ch + c] = b[4*c + j]
        self.Wg2 = (
            self.W.reshape(in_channel, 4, self.flatten_dim)
            .transpose(1, 0, 2)
            .reshape(4 * in_channel, self.flatten_dim)
            .T
        )  # (F, 4*ch)
        self.bg2 = self.b.reshape(in_channel, 4).T.reshape(1, 4 * in_channel)

    def __call__(self, x, y):
        bs, ch, H, Wd = x.shape
        assert y.shape[0] == bs
        hw = H * Wd

        y_flat = y.reshape(bs, -1).astype(jnp.float32)  # (bs, F)

        vmem_limit, budget = _vmem_limits()

        # ---- style projection + per-channel y stats (tiny, MXU) -----------
        k1_bytes = 4 * (self.Wg2.size + self.bg2.size + y_flat.size + bs * 4 * ch)
        if k1_bytes <= vmem_limit // 2:
            vmem = pl.BlockSpec(memory_space=pltpu.MemorySpace.VMEM)
            y_mean, y_std = pl.pallas_call(
                functools.partial(style_stats_kernel, ch=ch, eps=self.eps),
                out_shape=(
                    jax.ShapeDtypeStruct((bs, ch), jnp.float32),
                    jax.ShapeDtypeStruct((bs, ch), jnp.float32),
                ),
                in_specs=[vmem, vmem, vmem],
                out_specs=(vmem, vmem),
                compiler_params=pltpu.CompilerParams(
                    vmem_limit_bytes=vmem_limit
                ),
            )(y_flat, self.Wg2, self.bg2)
        else:
            # TODO(synk): tile the projection over F with a reduction grid axis
            # + accumulator instead of falling back to XLA for huge latents.
            y_mean, y_std = _style_stats_xla(y_flat, self.W, self.b, self.eps)

        # Pack stats so kernel 2 issues ONE small DMA per grid step, not two.
        stats = jnp.stack([y_mean, y_std], axis=-1)  # (bs, ch, 2) f32

        # ---- fused normalization + affine: the hot (ch, HW) pass ----------
        x3 = x.reshape(bs, ch, hw)

        tc = _pick_channel_tile(bs, ch, hw, x.dtype.itemsize, budget)
        n_ct = pl.cdiv(ch, tc)

        # The HW axis is kept as one full block (== array dim, always legal);
        # reductions mask internal lane padding, so non-128-multiple H*W stays
        # numerically exact (only the last partial vreg store is masked).
        out3 = pl.pallas_call(
            functools.partial(adain_norm_kernel, eps=self.eps),
            out_shape=jax.ShapeDtypeStruct((bs, ch, hw), x.dtype),
            grid=(bs, n_ct),
            in_specs=[
                pl.BlockSpec((1, tc, hw), lambda b, c: (b, c, 0)),
                pl.BlockSpec((1, tc, 2), lambda b, c: (b, c, 0)),
            ],
            out_specs=pl.BlockSpec((1, tc, hw), lambda b, c: (b, c, 0)),
            compiler_params=pltpu.CompilerParams(
                dimension_semantics=("parallel", "parallel"),
                vmem_limit_bytes=vmem_limit,
            ),
            cost_estimate=pl.CostEstimate(
                flops=6 * bs * ch * hw,
                transcendentals=bs * ch,
                bytes_accessed=2 * bs * ch * hw * x.dtype.itemsize,
            ),
        )(x3, stats)

        return out3.reshape(bs, ch, H, Wd)


# ---------------------------------------------------------------------------
# Pure-JAX reference (mirrors the PyTorch forward exactly)
# ---------------------------------------------------------------------------
def adain_ref(x, y, W, b, eps):
    bs, ch = x.shape[:2]
    x_ = x.reshape(bs, ch, -1)
    y_proj = (
        jnp.dot(y.reshape(bs, -1), W.T, precision=jax.lax.Precision.HIGHEST) + b
    )
    y_ = y_proj.reshape(bs, ch, -1)

    def c_norm(a):
        var = jnp.var(a, axis=-1, ddof=1) + eps  # unbiased, like torch.var
        std = jnp.sqrt(var)[..., None, None]
        mean = jnp.mean(a, axis=-1)[..., None, None]
        return std, mean

    x_std, x_mean = c_norm(x_)
    y_std, y_mean = c_norm(y_)
    return (x - x_mean) / x_std * y_std + y_mean


if __name__ == "__main__":
    key = jax.random.PRNGKey(0)
    k1, k2, k3 = jax.random.split(key, 3)

    bs, ch, H, W = 2, 4, 16, 16
    latent_shape = (4, 4, 4)  # flatten_dim = 64

    x = jax.random.normal(k1, (bs, ch, H, W), jnp.float32)
    y = jax.random.normal(k2, (bs,) + latent_shape, jnp.float32)

    mod = AdaINPallas(ch, latent_shape, eps=1e-5, key=k3)
    out = jax.block_until_ready(mod(x, y))

    ref = adain_ref(x, y, mod.W, mod.b, mod.eps)
    assert out.shape == (bs, ch, H, W)
    assert jnp.allclose(out, ref, rtol=1e-4, atol=1e-4), "mismatch vs reference"

    print("KERNEL_OK")
</pallas_src>

<mosaic_0001>
module attributes {stable_mosaic.version = 11 : i64} {
  func.func @style_stats_kernel(%arg0: memref<2x64xf32, #tpu.memory_space<vmem>>, %arg1: memref<64x16xf32, #tpu.memory_space<vmem>>, %arg2: memref<1x16xf32, #tpu.memory_space<vmem>>, %arg3: memref<2x4xf32, #tpu.memory_space<vmem>>, %arg4: memref<2x4xf32, #tpu.memory_space<vmem>>) attributes {dimension_semantics = [], scalar_prefetch = 0 : i64, scratch_operands = 0 : i64, tpu.core_type = #tpu.core_type<tc>} {
    %c0 = arith.constant 0 : index
    %c0_0 = arith.constant 0 : index
    %0 = vector.load %arg0[%c0, %c0_0] : memref<2x64xf32, #tpu.memory_space<vmem>>, vector<2x64xf32>
    %c0_1 = arith.constant 0 : index
    %c0_2 = arith.constant 0 : index
    %1 = vector.load %arg1[%c0_1, %c0_2] : memref<64x16xf32, #tpu.memory_space<vmem>>, vector<64x16xf32>
    %cst = arith.constant dense<0.000000e+00> : vector<2x16xf32>
    %2 = tpu.matmul %0, %1, %cst {dimension_numbers = #tpu.dot_dimension_numbers<[1], [0], [0], [1], [0, 0, 1, 1], [], []>, precision = #tpu.contract_precision<fp32>} : vector<2x64xf32>, vector<64x16xf32>, vector<2x16xf32> -> vector<2x16xf32>
    %c0_3 = arith.constant 0 : index
    %c0_4 = arith.constant 0 : index
    %3 = vector.load %arg2[%c0_3, %c0_4] : memref<1x16xf32, #tpu.memory_space<vmem>>, vector<1x16xf32>
    %4 = vector.broadcast %3 : vector<1x16xf32> to vector<2x16xf32>
    %5 = arith.addf %2, %4 : vector<2x16xf32>
    %6 = vector.extract_strided_slice %5 {offsets = [0, 0], sizes = [2, 4], strides = [1, 1]} : vector<2x16xf32> to vector<2x4xf32>
    %7 = vector.extract_strided_slice %5 {offsets = [0, 4], sizes = [2, 4], strides = [1, 1]} : vector<2x16xf32> to vector<2x4xf32>
    %8 = vector.extract_strided_slice %5 {offsets = [0, 8], sizes = [2, 4], strides = [1, 1]} : vector<2x16xf32> to vector<2x4xf32>
    %9 = vector.extract_strided_slice %5 {offsets = [0, 12], sizes = [2, 4], strides = [1, 1]} : vector<2x16xf32> to vector<2x4xf32>
    %10 = arith.addf %6, %7 : vector<2x4xf32>
    %11 = arith.addf %10, %8 : vector<2x4xf32>
    %12 = arith.addf %11, %9 : vector<2x4xf32>
    %cst_5 = arith.constant 2.500000e-01 : f32
    %13 = vector.broadcast %cst_5 : f32 to vector<2x4xf32>
    %14 = arith.mulf %12, %13 : vector<2x4xf32>
    %15 = arith.subf %6, %14 : vector<2x4xf32>
    %16 = arith.mulf %15, %15 : vector<2x4xf32>
    %17 = arith.subf %7, %14 : vector<2x4xf32>
    %18 = arith.mulf %17, %17 : vector<2x4xf32>
    %19 = arith.addf %16, %18 : vector<2x4xf32>
    %20 = arith.subf %8, %14 : vector<2x4xf32>
    %21 = arith.mulf %20, %20 : vector<2x4xf32>
    %22 = arith.addf %19, %21 : vector<2x4xf32>
    %23 = arith.subf %9, %14 : vector<2x4xf32>
    %24 = arith.mulf %23, %23 : vector<2x4xf32>
    %25 = arith.addf %22, %24 : vector<2x4xf32>
    %cst_6 = arith.constant 0.333333343 : f32
    %26 = vector.broadcast %cst_6 : f32 to vector<2x4xf32>
    %27 = arith.mulf %25, %26 : vector<2x4xf32>
    %c0_7 = arith.constant 0 : index
    %c0_8 = arith.constant 0 : index
    %28 = vector.load %arg3[%c0_7, %c0_8] : memref<2x4xf32, #tpu.memory_space<vmem>>, vector<2x4xf32>
    tpu.vector_store %arg3[%c0_7, %c0_8], %14 {strides = array<i32>} : memref<2x4xf32, #tpu.memory_space<vmem>>, vector<2x4xf32>,
    %cst_9 = arith.constant 9.99999974E-6 : f32
    %29 = vector.broadcast %cst_9 : f32 to vector<2x4xf32>
    %30 = arith.addf %27, %29 : vector<2x4xf32>
    %31 = math.sqrt %30 : vector<2x4xf32>
    %c0_10 = arith.constant 0 : index
    %c0_11 = arith.constant 0 : index
    %32 = vector.load %arg4[%c0_10, %c0_11] : memref<2x4xf32, #tpu.memory_space<vmem>>, vector<2x4xf32>
    tpu.vector_store %arg4[%c0_10, %c0_11], %31 {strides = array<i32>} : memref<2x4xf32, #tpu.memory_space<vmem>>, vector<2x4xf32>,
    return
  }
}

</mosaic_0001>

<llo_original>
// kernel: tpu_custom_call.1
$region0: #{tpu_custom_call.1}
  #allocation0 [shape = 'u32[]', space=smem, size = 0x4, offset = 0x4, fixed_abs, tag = 'smem constant byte address 0x4 - core index']
  #allocation1 [shape = 'u32[144,128]{1,0:T(1,128)}', space=vmem, size = 0x12000, scoped, tag = 'internal scratch']
  %s0 = inlined_call_operand.vmem [shape: f32[2,64], index: 0, kind: input, shape index: {}]
  %s1 = inlined_call_operand.vmem [shape: f32[64,16], index: 1, kind: input, shape index: {}]
  %s2 = inlined_call_operand.vmem [shape: f32[1,16], index: 2, kind: input, shape index: {}]
  %s3 = inlined_call_operand.hbm [shape: f32[2,4], index: 3, kind: output, shape index: {0}]
  %s4 = inlined_call_operand.hbm [shape: f32[2,4], index: 4, kind: output, shape index: {1}]
  %5 = xla_tuple %s3, %s4
  %s6 = sld [smem:[#allocation0]]
  $region30: #{tpu_custom_call.1} parent=0
    _
  %s8 = ssub.s32 1, %s6
  %s9 = scalar_select 0, %s8, %s6
  $region1: #{tpu_custom_call.1} parent=0
    #allocation2 [shape = 'u8[1024]{0}', space=vmem, size = 0x400, scoped, tag = 'output window, operand 0, single buffered']
    #allocation3 [shape = 's32[1]{0}', space=sflag, size = 0x4, scoped, tag = 'scoped memory for tpu_custom_call.1']
    #allocation4 [shape = 'u8[1024]{0}', space=vmem, size = 0x400, scoped, tag = 'output window, operand 1, single buffered']
    #allocation5 [shape = 's32[1]{0}', space=sflag, size = 0x4, scoped, tag = 'scoped memory for tpu_custom_call.1']
    %10 = vsyncpa [#allocation3], 0
    %11 = vsyncpa [#allocation5], 0
    // Predicated region
    $region2: #{tpu_custom_call.1} parent=1 // pred_check
      _
    $region3: #{tpu_custom_call.1} parent=1 // pred_check_branch
      %13 = sbr.rel (0) target = $region5
    $region4: #{tpu_custom_call.1} parent=1 // pred_region
      _
    $region5: #{tpu_custom_call.1} parent=1 // pred_fallthru
      _
    // Predicated region
    $region6: #{tpu_custom_call.1} parent=1 // pred_check
      _
    $region7: #{tpu_custom_call.1} parent=1 // pred_check_branch
      %15 = sbr.rel (0) target = $region9
    $region8: #{tpu_custom_call.1} parent=1 // pred_region
      _
    $region9: #{tpu_custom_call.1} parent=1 // pred_fallthru
      _
    // Predicated region
    $region10: #{tpu_custom_call.1} parent=1 // pred_check
      _
    $region11: #{tpu_custom_call.1} parent=1 // pred_check_branch
      %17 = sbr.rel (0) target = $region13
    $region12: #{tpu_custom_call.1} parent=1 // pred_region
      _
    $region13: #{tpu_custom_call.1} parent=1 // pred_fallthru
      _
    %v18 = vld [vmem:[%s0] sm:$0x3]
    %v19 = vld [vmem:[%s1] sm:$0xff]
    %v20 = vld [vmem:[%s1 + $0x8] sm:$0xff]
    %v21 = vld [vmem:[%s1 + $0x10] sm:$0xff]
    %v22 = vld [vmem:[%s1 + $0x18] sm:$0xff]
    %v23 = vld [vmem:[%s1 + $0x20] sm:$0xff]
    %v24 = vld [vmem:[%s1 + $0x28] sm:$0xff]
    %v25 = vld [vmem:[%s1 + $0x30] sm:$0xff]
    %v26 = vld [vmem:[%s1 + $0x38] sm:$0xff]
    %v27 = vld [vmem:[%s2] sm:$0x1]
    %v29 = vlaneseq
    %v30 = vshrl.u32 %v29, 7
    %v31 = vsub.s32 0, %v30
    %v32 = vrot.slane %v27, %v31
    %vm34 = vcmask 523264
    %v36 = vsel %vm34, %v18, 0
    %38 = vmatprep.subr.mxu0 0.0
    %v39 = vand.u32 %v19, 4294901760
    %40 = vmatpush1.msra.mxu0 %v39
    %41 = vmatprep.subr.mxu0 0.0
    %v42 = vand.u32 %v20, 4294901760
    %43 = vmatpush1.msra.mxu0 %v42
    %44 = vmatprep.subr.mxu0 0.0
    %v45 = vand.u32 %v21, 4294901760
    %46 = vmatpush1.msra.mxu0 %v45
    %47 = vmatprep.subr.mxu0 0.0
    %v48 = vand.u32 %v22, 4294901760
    %49 = vmatpush1.msra.mxu0 %v48
    %50 = vmatprep.subr.mxu0 0.0
    %v51 = vand.u32 %v23, 4294901760
    %52 = vmatpush1.msra.mxu0 %v51
    %53 = vmatprep.subr.mxu0 0.0
    %v54 = vand.u32 %v24, 4294901760
    %55 = vmatpush1.msra.mxu0 %v54
    %56 = vmatprep.subr.mxu0 0.0
    %v57 = vand.u32 %v25, 4294901760
    %58 = vmatpush1.msra.mxu0 %v57
    %59 = vmatprep.subr.mxu0 0.0
    %v60 = vand.u32 %v26, 4294901760
    %61 = vmatpush1.msra.mxu0 %v60
    %62 = vmatprep.subr.mxu0 0.0
    %63 = vmatpush1.msra.mxu0 0.0
    %64 = vmatprep.subr.mxu0 0.0
    %65 = vmatpush1.msra.mxu0 0.0
    %66 = vmatprep.subr.mxu0 0.0
    %67 = vmatpush1.msra.mxu0 0.0
    %68 = vmatprep.subr.mxu0 0.0
    %69 = vmatpush1.msra.mxu0 0.0
    %70 = vmatprep.subr.mxu0 0.0
    %71 = vmatpush1.msra.mxu0 0.0
    %72 = vmatprep.subr.mxu0 0.0
    %73 = vmatpush1.msra.mxu0 0.0
    %74 = vmatprep.subr.mxu0 0.0
    %75 = vmatpush1.msra.mxu0 0.0
    %76 = vmatprep.subr.mxu0 0.0
    %77 = vmatpush1.msra.mxu0 0.0
    %78 = vmatprep.subr.mxu0 0.0
    %79 = vmatpush1.msra.mxu0 0.0
    %80 = vmatprep.subr.mxu0 0.0
    %81 = vmatpush1.msra.mxu0 0.0
    %82 = vmatprep.subr.mxu0 0.0
    %83 = vmatpush1.msra.mxu0 0.0
    %84 = vmatprep.subr.mxu0 0.0
    %85 = vmatpush1.msra.mxu0 0.0
    %86 = vmatprep.subr.mxu0 0.0
    %87 = vmatpush1.msra.mxu0 0.0
    %88 = vmatprep.subr.mxu0 0.0
    %89 = vmatpush1.msra.mxu0 0.0
    %90 = vmatprep.subr.mxu0 0.0
    %91 = vmatpush1.msra.mxu0 0.0
    %92 = vmatprep.subr.mxu0 0.0
    %93 = vmatpush1.msra.mxu0 0.0
    %94 = vmatprep.subr.mxu0 0.0
    %95 = vmatpush1.msra.mxu0 0.0
    %96 = vmatprep.subr.mxu0 0.0
    %97 = vmatpush1.msra.mxu0 0.0
    %98 = vmatprep.subr.mxu0 0.0
    %99 = vmatpush1.msra.mxu0 0.0
    %100 = vmatprep.subr.mxu0 0.0
    %101 = vmatpush1.msra.mxu0 0.0
    %102 = vmatprep.subr.mxu0 0.0
    %103 = vmatpush1.msra.mxu0 0.0
    %104 = vmatprep.subr.mxu0 0.0
    %105 = vmatpush1.msra.mxu0 0.0
    %106 = vmatprep.subr.mxu0 0.0
    %107 = vmatpush1.msra.mxu0 0.0
    %108 = vmatprep.subr.mxu0 0.0
    %109 = vmatpush1.msra.mxu0 0.0
    %110 = vmatprep.mubr.f32.mxu0 0.0
    %v111 = vand.u32 %v36, 4294901760
    %v112 = vsub.f32 %v36, %v111
    %v113 = vand.u32 %v112, 4294901760
    %v114 = vsub.f32 %v112, %v113
    %v115 = vand.u32 %v114, 4294901760
    %116 = vmatmul.mubr.f32.gmra.mrb[0].mxu0 %v115
    %v117 = vpop.f32.mrb[0].mxu0
    %v118 = vadd.f32 %v32, %v117
    %v119 = vpop.f32.mrb[0].mxu0
    %120 = vdwg.mxu0
    %121 = vmatprep.subr.mxu0 0.0
    %v122 = vand.u32 %v19, 4294901760
    %v123 = vsub.f32 %v19, %v122
    %v124 = vand.u32 %v123, 4294901760
    %v125 = vsub.f32 %v123, %v124
    %v126 = vand.u32 %v125, 4294901760
    %127 = vmatpush1.msra.mxu0 %v126
    %128 = vmatprep.subr.mxu0 0.0
    %v129 = vand.u32 %v20, 4294901760
    %v130 = vsub.f32 %v20, %v129
    %v131 = vand.u32 %v130, 4294901760
    %v132 = vsub.f32 %v130, %v131
    %v133 = vand.u32 %v132, 4294901760
    %134 = vmatpush1.msra.mxu0 %v133
    %135 = vmatprep.subr.mxu0 0.0
    %v136 = vand.u32 %v21, 4294901760
    %v137 = vsub.f32 %v21, %v136
    %v138 = vand.u32 %v137, 4294901760
    %v139 = vsub.f32 %v137, %v138
    %v140 = vand.u32 %v139, 4294901760
    %141 = vmatpush1.msra.mxu0 %v140
    %142 = vmatprep.subr.mxu0 0.0
    %v143 = vand.u32 %v22, 4294901760
    %v144 = vsub.f32 %v22, %v143
    %v145 = vand.u32 %v144, 4294901760
    %v146 = vsub.f32 %v144, %v145
    %v147 = vand.u32 %v146, 4294901760
    %148 = vmatpush1.msra.mxu0 %v147
    %149 = vmatprep.subr.mxu0 0.0
    %v150 = vand.u32 %v23, 4294901760
    %v151 = vsub.f32 %v23, %v150
    %v152 = vand.u32 %v151, 4294901760
    %v153 = vsub.f32 %v151, %v152
    %v154 = vand.u32 %v153, 4294901760
    %155 = vmatpush1.msra.mxu0 %v154
    %156 = vmatprep.subr.mxu0 0.0
    %v157 = vand.u32 %v24, 4294901760
    %v158 = vsub.f32 %v24, %v157
    %v159 = vand.u32 %v158, 4294901760
    %v160 = vsub.f32 %v158, %v159
    %v161 = vand.u32 %v160, 4294901760
    %162 = vmatpush1.msra.mxu0 %v161
    %163 = vmatprep.subr.mxu0 0.0
    %v164 = vand.u32 %v25, 4294901760
    %v165 = vsub.f32 %v25, %v164
    %v166 = vand.u32 %v165, 4294901760
    %v167 = vsub.f32 %v165, %v166
    %v168 = vand.u32 %v167, 4294901760
    %169 = vmatpush1.msra.mxu0 %v168
    %170 = vmatprep.subr.mxu0 0.0
    %v171 = vand.u32 %v26, 4294901760
    %v172 = vsub.f32 %v26, %v171
    %v173 = vand.u32 %v172, 4294901760
    %v174 = vsub.f32 %v172, %v173
    %v175 = vand.u32 %v174, 4294901760
    %176 = vmatpush1.msra.mxu0 %v175
    %177 = vmatprep.subr.mxu0 0.0
    %178 = vmatpush1.msra.mxu0 0.0
    %179 = vmatprep.subr.mxu0 0.0
    %180 = vmatpush1.msra.mxu0 0.0
    %181 = vmatprep.subr.mxu0 0.0
    %182 = vmatpush1.msra.mxu0 0.0
    %183 = vmatprep.subr.mxu0 0.0
    %184 = vmatpush1.msra.mxu0 0.0
    %185 = vmatprep.subr.mxu0 0.0
    %186 = vmatpush1.msra.mxu0 0.0
    %187 = vmatprep.subr.mxu0 0.0
    %188 = vmatpush1.msra.mxu0 0.0
    %189 = vmatprep.subr.mxu0 0.0
    %190 = vmatpush1.msra.mxu0 0.0
    %191 = vmatprep.subr.mxu0 0.0
    %192 = vmatpush1.msra.mxu0 0.0
    %193 = vmatprep.subr.mxu0 0.0
    %194 = vmatpush1.msra.mxu0 0.0
    %195 = vmatprep.subr.mxu0 0.0
    %196 = vmatpush1.msra.mxu0 0.0
    %197 = vmatprep.subr.mxu0 0.0
    %198 = vmatpush1.msra.mxu0 0.0
    %199 = vmatprep.subr.mxu0 0.0
    %200 = vmatpush1.msra.mxu0 0.0
    %201 = vmatprep.subr.mxu0 0.0
    %202 = vmatpush1.msra.mxu0 0.0
    %203 = vmatprep.subr.mxu0 0.0
    %204 = vmatpush1.msra.mxu0 0.0
    %205 = vmatprep.subr.mxu0 0.0
    %206 = vmatpush1.msra.mxu0 0.0
    %207 = vmatprep.subr.mxu0 0.0
    %208 = vmatpush1.msra.mxu0 0.0
    %209 = vmatprep.subr.mxu0 0.0
    %210 = vmatpush1.msra.mxu0 0.0
    %211 = vmatprep.subr.mxu0 0.0
    %212 = vmatpush1.msra.mxu0 0.0
    %213 = vmatprep.subr.mxu0 0.0
    %214 = vmatpush1.msra.mxu0 0.0
    %215 = vmatprep.subr.mxu0 0.0
    %216 = vmatpush1.msra.mxu0 0.0
    %217 = vmatprep.subr.mxu0 0.0
    %218 = vmatpush1.msra.mxu0 0.0
    %219 = vmatprep.subr.mxu0 0.0
    %220 = vmatpush1.msra.mxu0 0.0
    %221 = vmatprep.subr.mxu0 0.0
    %222 = vmatpush1.msra.mxu0 0.0
    %223 = vmatprep.subr.mxu0 0.0
    %224 = vmatpush1.msra.mxu0 0.0
    %225 = vmatprep.mubr.f32.mxu0 0.0
    %v226 = vand.u32 %v36, 4294901760
    %227 = vmatmul.mubr.f32.gmra.mrb[0].mxu0 %v226
    %v228 = vpop.f32.mrb[0].mxu0
    %v229 = vadd.f32 %v118, %v228
    %v230 = vpop.f32.mrb[0].mxu0
    %231 = vdwg.mxu0
    %232 = vmatprep.subr.mxu0 0.0
    %v233 = vand.u32 %v19, 4294901760
    %v234 = vsub.f32 %v19, %v233
    %235 = vmatpush1.msra.mxu0 %v234
    %236 = vmatprep.subr.mxu0 0.0
    %v237 = vand.u32 %v20, 4294901760
    %v238 = vsub.f32 %v20, %v237
    %239 = vmatpush1.msra.mxu0 %v238
    %240 = vmatprep.subr.mxu0 0.0
    %v241 = vand.u32 %v21, 4294901760
    %v242 = vsub.f32 %v21, %v241
    %243 = vmatpush1.msra.mxu0 %v242
    %244 = vmatprep.subr.mxu0 0.0
    %v245 = vand.u32 %v22, 4294901760
    %v246 = vsub.f32 %v22, %v245
    %247 = vmatpush1.msra.mxu0 %v246
    %248 = vmatprep.subr.mxu0 0.0
    %v249 = vand.u32 %v23, 4294901760
    %v250 = vsub.f32 %v23, %v249
    %251 = vmatpush1.msra.mxu0 %v250
    %252 = vmatprep.subr.mxu0 0.0
    %v253 = vand.u32 %v24, 4294901760
    %v254 = vsub.f32 %v24, %v253
    %255 = vmatpush1.msra.mxu0 %v254
    %256 = vmatprep.subr.mxu0 0.0
    %v257 = vand.u32 %v25, 4294901760
    %v258 = vsub.f32 %v25, %v257
    %259 = vmatpush1.msra.mxu0 %v258
    %260 = vmatprep.subr.mxu0 0.0
    %v261 = vand.u32 %v26, 4294901760
    %v262 = vsub.f32 %v26, %v261
    %263 = vmatpush1.msra.mxu0 %v262
    %264 = vmatprep.subr.mxu0 0.0
    %265 = vmatpush1.msra.mxu0 0.0
    %266 = vmatprep.subr.mxu0 0.0
    %267 = vmatpush1.msra.mxu0 0.0
    %268 = vmatprep.subr.mxu0 0.0
    %269 = vmatpush1.msra.mxu0 0.0
    %270 = vmatprep.subr.mxu0 0.0
    %271 = vmatpush1.msra.mxu0 0.0
    %272 = vmatprep.subr.mxu0 0.0
    %273 = vmatpush1.msra.mxu0 0.0
    %274 = vmatprep.subr.mxu0 0.0
    %275 = vmatpush1.msra.mxu0 0.0
    %276 = vmatprep.subr.mxu0 0.0
    %277 = vmatpush1.msra.mxu0 0.0
    %278 = vmatprep.subr.mxu0 0.0
    %279 = vmatpush1.msra.mxu0 0.0
    %280 = vmatprep.subr.mxu0 0.0
    %281 = vmatpush1.msra.mxu0 0.0
    %282 = vmatprep.subr.mxu0 0.0
    %283 = vmatpush1.msra.mxu0 0.0
    %284 = vmatprep.subr.mxu0 0.0
    %285 = vmatpush1.msra.mxu0 0.0
    %286 = vmatprep.subr.mxu0 0.0
    %287 = vmatpush1.msra.mxu0 0.0
    %288 = vmatprep.subr.mxu0 0.0
    %289 = vmatpush1.msra.mxu0 0.0
    %290 = vmatprep.subr.mxu0 0.0
    %291 = vmatpush1.msra.mxu0 0.0
    %292 = vmatprep.subr.mxu0 0.0
    %293 = vmatpush1.msra.mxu0 0.0
    %294 = vmatprep.subr.mxu0 0.0
    %295 = vmatpush1.msra.mxu0 0.0
    %296 = vmatprep.subr.mxu0 0.0
    %297 = vmatpush1.msra.mxu0 0.0
    %298 = vmatprep.subr.mxu0 0.0
    %299 = vmatpush1.msra.mxu0 0.0
    %300 = vmatprep.subr.mxu0 0.0
    %301 = vmatpush1.msra.mxu0 0.0
    %302 = vmatprep.subr.mxu0 0.0
    %303 = vmatpush1.msra.mxu0 0.0
    %304 = vmatprep.subr.mxu0 0.0
    %305 = vmatpush1.msra.mxu0 0.0
    %306 = vmatprep.subr.mxu0 0.0
    %307 = vmatpush1.msra.mxu0 0.0
    %308 = vmatprep.subr.mxu0 0.0
    %309 = vmatpush1.msra.mxu0 0.0
    %310 = vmatprep.subr.mxu0 0.0
    %311 = vmatpush1.msra.mxu0 0.0
    %312 = vmatprep.mubr.f32.mxu0 0.0
    %v313 = vand.u32 %v36, 4294901760
    %v314 = vsub.f32 %v36, %v313
    %315 = vmatmul.mubr.f32.gmra.mrb[0].mxu0 %v314
    %v316 = vpop.f32.mrb[0].mxu0
    %v317 = vadd.f32 %v229, %v316
    %v318 = vpop.f32.mrb[0].mxu0
    %319 = vdwg.mxu0
    %320 = vmatprep.subr.mxu0 0.0
    %v321 = vand.u32 %v19, 4294901760
    %322 = vmatpush1.msra.mxu0 %v321
    %323 = vmatprep.subr.mxu0 0.0
    %v324 = vand.u32 %v20, 4294901760
    %325 = vmatpush1.msra.mxu0 %v324
    %326 = vmatprep.subr.mxu0 0.0
    %v327 = vand.u32 %v21, 4294901760
    %328 = vmatpush1.msra.mxu0 %v327
    %329 = vmatprep.subr.mxu0 0.0
    %v330 = vand.u32 %v22, 4294901760
    %331 = vmatpush1.msra.mxu0 %v330
    %332 = vmatprep.subr.mxu0 0.0
    %v333 = vand.u32 %v23, 4294901760
    %334 = vmatpush1.msra.mxu0 %v333
    %335 = vmatprep.subr.mxu0 0.0
    %v336 = vand.u32 %v24, 4294901760
    %337 = vmatpush1.msra.mxu0 %v336
    %338 = vmatprep.subr.mxu0 0.0
    %v339 = vand.u32 %v25, 4294901760
    %340 = vmatpush1.msra.mxu0 %v339
    %341 = vmatprep.subr.mxu0 0.0
    %v342 = vand.u32 %v26, 4294901760
    %343 = vmatpush1.msra.mxu0 %v342
    %344 = vmatprep.subr.mxu0 0.0
    %345 = vmatpush1.msra.mxu0 0.0
    %346 = vmatprep.subr.mxu0 0.0
    %347 = vmatpush1.msra.mxu0 0.0
    %348 = vmatprep.subr.mxu0 0.0
    %349 = vmatpush1.msra.mxu0 0.0
    %350 = vmatprep.subr.mxu0 0.0
    %351 = vmatpush1.msra.mxu0 0.0
    %352 = vmatprep.subr.mxu0 0.0
    %353 = vmatpush1.msra.mxu0 0.0
    %354 = vmatprep.subr.mxu0 0.0
    %355 = vmatpush1.msra.mxu0 0.0
    %356 = vmatprep.subr.mxu0 0.0
    %357 = vmatpush1.msra.mxu0 0.0
    %358 = vmatprep.subr.mxu0 0.0
    %359 = vmatpush1.msra.mxu0 0.0
    %360 = vmatprep.subr.mxu0 0.0
    %361 = vmatpush1.msra.mxu0 0.0
    %362 = vmatprep.subr.mxu0 0.0
    %363 = vmatpush1.msra.mxu0 0.0
    %364 = vmatprep.subr.mxu0 0.0
    %365 = vmatpush1.msra.mxu0 0.0
    %366 = vmatprep.subr.mxu0 0.0
    %367 = vmatpush1.msra.mxu0 0.0
    %368 = vmatprep.subr.mxu0 0.0
    %369 = vmatpush1.msra.mxu0 0.0
    %370 = vmatprep.subr.mxu0 0.0
    %371 = vmatpush1.msra.mxu0 0.0
    %372 = vmatprep.subr.mxu0 0.0
    %373 = vmatpush1.msra.mxu0 0.0
    %374 = vmatprep.subr.mxu0 0.0
    %375 = vmatpush1.msra.mxu0 0.0
    %376 = vmatprep.subr.mxu0 0.0
    %377 = vmatpush1.msra.mxu0 0.0
    %378 = vmatprep.subr.mxu0 0.0
    %379 = vmatpush1.msra.mxu0 0.0
    %380 = vmatprep.subr.mxu0 0.0
    %381 = vmatpush1.msra.mxu0 0.0
    %382 = vmatprep.subr.mxu0 0.0
    %383 = vmatpush1.msra.mxu0 0.0
    %384 = vmatprep.subr.mxu0 0.0
    %385 = vmatpush1.msra.mxu0 0.0
    %386 = vmatprep.subr.mxu0 0.0
    %387 = vmatpush1.msra.mxu0 0.0
    %388 = vmatprep.subr.mxu0 0.0
    %389 = vmatpush1.msra.mxu0 0.0
    %390 = vmatprep.subr.mxu0 0.0
    %391 = vmatpush1.msra.mxu0 0.0
    %392 = vmatprep.mubr.f32.mxu0 0.0
    %v393 = vand.u32 %v36, 4294901760
    %v394 = vsub.f32 %v36, %v393
    %v395 = vand.u32 %v394, 4294901760
    %396 = vmatmul.mubr.f32.gmra.mrb[0].mxu0 %v395
    %v397 = vpop.f32.mrb[0].mxu0
    %v398 = vadd.f32 %v317, %v397
    %v399 = vpop.f32.mrb[0].mxu0
    %400 = vdwg.mxu0
    %401 = vmatprep.subr.mxu0 0.0
    %v402 = vand.u32 %v19, 4294901760
    %v403 = vsub.f32 %v19, %v402
    %v404 = vand.u32 %v403, 4294901760
    %405 = vmatpush1.msra.mxu0 %v404
    %406 = vmatprep.subr.mxu0 0.0
    %v407 = vand.u32 %v20, 4294901760
    %v408 = vsub.f32 %v20, %v407
    %v409 = vand.u32 %v408, 4294901760
    %410 = vmatpush1.msra.mxu0 %v409
    %411 = vmatprep.subr.mxu0 0.0
    %v412 = vand.u32 %v21, 4294901760
    %v413 = vsub.f32 %v21, %v412
    %v414 = vand.u32 %v413, 4294901760
    %415 = vmatpush1.msra.mxu0 %v414
    %416 = vmatprep.subr.mxu0 0.0
    %v417 = vand.u32 %v22, 4294901760
    %v418 = vsub.f32 %v22, %v417
    %v419 = vand.u32 %v418, 4294901760
    %420 = vmatpush1.msra.mxu0 %v419
    %421 = vmatprep.subr.mxu0 0.0
    %v422 = vand.u32 %v23, 4294901760
    %v423 = vsub.f32 %v23, %v422
    %v424 = vand.u32 %v423, 4294901760
    %425 = vmatpush1.msra.mxu0 %v424
    %426 = vmatprep.subr.mxu0 0.0
    %v427 = vand.u32 %v24, 4294901760
    %v428 = vsub.f32 %v24, %v427
    %v429 = vand.u32 %v428, 4294901760
    %430 = vmatpush1.msra.mxu0 %v429
    %431 = vmatprep.subr.mxu0 0.0
    %v432 = vand.u32 %v25, 4294901760
    %v433 = vsub.f32 %v25, %v432
    %v434 = vand.u32 %v433, 4294901760
    %435 = vmatpush1.msra.mxu0 %v434
    %436 = vmatprep.subr.mxu0 0.0
    %v437 = vand.u32 %v26, 4294901760
    %v438 = vsub.f32 %v26, %v437
    %v439 = vand.u32 %v438, 4294901760
    %440 = vmatpush1.msra.mxu0 %v439
    %441 = vmatprep.subr.mxu0 0.0
    %442 = vmatpush1.msra.mxu0 0.0
    %443 = vmatprep.subr.mxu0 0.0
    %444 = vmatpush1.msra.mxu0 0.0
    %445 = vmatprep.subr.mxu0 0.0
    %446 = vmatpush1.msra.mxu0 0.0
    %447 = vmatprep.subr.mxu0 0.0
    %448 = vmatpush1.msra.mxu0 0.0
    %449 = vmatprep.subr.mxu0 0.0
    %450 = vmatpush1.msra.mxu0 0.0
    %451 = vmatprep.subr.mxu0 0.0
    %452 = vmatpush1.msra.mxu0 0.0
    %453 = vmatprep.subr.mxu0 0.0
    %454 = vmatpush1.msra.mxu0 0.0
    %455 = vmatprep.subr.mxu0 0.0
    %456 = vmatpush1.msra.mxu0 0.0
    %457 = vmatprep.subr.mxu0 0.0
    %458 = vmatpush1.msra.mxu0 0.0
    %459 = vmatprep.subr.mxu0 0.0
    %460 = vmatpush1.msra.mxu0 0.0
    %461 = vmatprep.subr.mxu0 0.0
    %462 = vmatpush1.msra.mxu0 0.0
    %463 = vmatprep.subr.mxu0 0.0
    %464 = vmatpush1.msra.mxu0 0.0
    %465 = vmatprep.subr.mxu0 0.0
    %466 = vmatpush1.msra.mxu0 0.0
    %467 = vmatprep.subr.mxu0 0.0
    %468 = vmatpush1.msra.mxu0 0.0
    %469 = vmatprep.subr.mxu0 0.0
    %470 = vmatpush1.msra.mxu0 0.0
    %471 = vmatprep.subr.mxu0 0.0
    %472 = vmatpush1.msra.mxu0 0.0
    %473 = vmatprep.subr.mxu0 0.0
    %474 = vmatpush1.msra.mxu0 0.0
    %475 = vmatprep.subr.mxu0 0.0
    %476 = vmatpush1.msra.mxu0 0.0
    %477 = vmatprep.subr.mxu0 0.0
    %478 = vmatpush1.msra.mxu0 0.0
    %479 = vmatprep.subr.mxu0 0.0
    %480 = vmatpush1.msra.mxu0 0.0
    %481 = vmatprep.subr.mxu0 0.0
    %482 = vmatpush1.msra.mxu0 0.0
    %483 = vmatprep.subr.mxu0 0.0
    %484 = vmatpush1.msra.mxu0 0.0
    %485 = vmatprep.subr.mxu0 0.0
    %486 = vmatpush1.msra.mxu0 0.0
    %487 = vmatprep.subr.mxu0 0.0
    %488 = vmatpush1.msra.mxu0 0.0
    %489 = vmatprep.mubr.f32.mxu0 0.0
    %v490 = vand.u32 %v36, 4294901760
    %491 = vmatmul.mubr.f32.gmra.mrb[0].mxu0 %v490
    %v492 = vpop.f32.mrb[0].mxu0
    %v493 = vadd.f32 %v398, %v492
    %v494 = vpop.f32.mrb[0].mxu0
    %495 = vdwg.mxu0
    %496 = vmatprep.subr.mxu0 0.0
    %v497 = vand.u32 %v19, 4294901760
    %498 = vmatpush1.msra.mxu0 %v497
    %499 = vmatprep.subr.mxu0 0.0
    %v500 = vand.u32 %v20, 4294901760
    %501 = vmatpush1.msra.mxu0 %v500
    %502 = vmatprep.subr.mxu0 0.0
    %v503 = vand.u32 %v21, 4294901760
    %504 = vmatpush1.msra.mxu0 %v503
    %505 = vmatprep.subr.mxu0 0.0
    %v506 = vand.u32 %v22, 4294901760
    %507 = vmatpush1.msra.mxu0 %v506
    %508 = vmatprep.subr.mxu0 0.0
    %v509 = vand.u32 %v23, 4294901760
    %510 = vmatpush1.msra.mxu0 %v509
    %511 = vmatprep.subr.mxu0 0.0
    %v512 = vand.u32 %v24, 4294901760
    %513 = vmatpush1.msra.mxu0 %v512
    %514 = vmatprep.subr.mxu0 0.0
    %v515 = vand.u32 %v25, 4294901760
    %516 = vmatpush1.msra.mxu0 %v515
    %517 = vmatprep.subr.mxu0 0.0
    %v518 = vand.u32 %v26, 4294901760
    %519 = vmatpush1.msra.mxu0 %v518
    %520 = vmatprep.subr.mxu0 0.0
    %521 = vmatpush1.msra.mxu0 0.0
    %522 = vmatprep.subr.mxu0 0.0
    %523 = vmatpush1.msra.mxu0 0.0
    %524 = vmatprep.subr.mxu0 0.0
    %525 = vmatpush1.msra.mxu0 0.0
    %526 = vmatprep.subr.mxu0 0.0
    %527 = vmatpush1.msra.mxu0 0.0
    %528 = vmatprep.subr.mxu0 0.0
    %529 = vmatpush1.msra.mxu0 0.0
    %530 = vmatprep.subr.mxu0 0.0
    %531 = vmatpush1.msra.mxu0 0.0
    %532 = vmatprep.subr.mxu0 0.0
    %533 = vmatpush1.msra.mxu0 0.0
    %534 = vmatprep.subr.mxu0 0.0
    %535 = vmatpush1.msra.mxu0 0.0
    %536 = vmatprep.subr.mxu0 0.0
    %537 = vmatpush1.msra.mxu0 0.0
    %538 = vmatprep.subr.mxu0 0.0
    %539 = vmatpush1.msra.mxu0 0.0
    %540 = vmatprep.subr.mxu0 0.0
    %541 = vmatpush1.msra.mxu0 0.0
    %542 = vmatprep.subr.mxu0 0.0
    %543 = vmatpush1.msra.mxu0 0.0
    %544 = vmatprep.subr.mxu0 0.0
    %545 = vmatpush1.msra.mxu0 0.0
    %546 = vmatprep.subr.mxu0 0.0
    %547 = vmatpush1.msra.mxu0 0.0
    %548 = vmatprep.subr.mxu0 0.0
    %549 = vmatpush1.msra.mxu0 0.0
    %550 = vmatprep.subr.mxu0 0.0
    %551 = vmatpush1.msra.mxu0 0.0
    %552 = vmatprep.subr.mxu0 0.0
    %553 = vmatpush1.msra.mxu0 0.0
    %554 = vmatprep.subr.mxu0 0.0
    %555 = vmatpush1.msra.mxu0 0.0
    %556 = vmatprep.subr.mxu0 0.0
    %557 = vmatpush1.msra.mxu0 0.0
    %558 = vmatprep.subr.mxu0 0.0
    %559 = vmatpush1.msra.mxu0 0.0
    %560 = vmatprep.subr.mxu0 0.0
    %561 = vmatpush1.msra.mxu0 0.0
    %562 = vmatprep.subr.mxu0 0.0
    %563 = vmatpush1.msra.mxu0 0.0
    %564 = vmatprep.subr.mxu0 0.0
    %565 = vmatpush1.msra.mxu0 0.0
    %566 = vmatprep.subr.mxu0 0.0
    %567 = vmatpush1.msra.mxu0 0.0
    %568 = vmatprep.mubr.f32.mxu0 0.0
    %v569 = vand.u32 %v36, 4294901760
    %570 = vmatmul.mubr.f32.gmra.mrb[0].mxu0 %v569
    %v571 = vpop.f32.mrb[0].mxu0
    %v572 = vadd.f32 %v493, %v571
    %v573 = vpop.f32.mrb[0].mxu0
    %574 = vdwg.mxu0
    %576 = vrot.lane.b32.xlu0 %v572, 124
    %v577 = vpop.permute.xlu0 %576
    %v579 = vadd.f32 %v572, %v577
    %580 = vrot.lane.b32.xlu0 %v572, 120
    %v581 = vpop.permute.xlu0 %580
    %v583 = vadd.f32 %v579, %v581
    %584 = vrot.lane.b32.xlu0 %v572, 116
    %v585 = vpop.permute.xlu0 %584
    %v587 = vadd.f32 %v583, %v585
    %v588 = vmul.f32 %v587, 0.25
    %v589 = vsub.f32 %v572, %v588
    %v590 = vmul.f32 %v589, %v589
    %592 = vrot.lane.b32.xlu0 %v588, 4
    %v593 = vpop.permute.xlu0 %592
    %v595 = vsub.f32 %v572, %v593
    %v596 = vmul.f32 %v595, %v595
    %598 = vrot.lane.b32.xlu0 %v596, 124
    %v599 = vpop.permute.xlu0 %598
    %v601 = vadd.f32 %v590, %v599
    %602 = vrot.lane.b32.xlu0 %v588, 8
    %v603 = vpop.permute.xlu0 %602
    %v605 = vsub.f32 %v572, %v603
    %v606 = vmul.f32 %v605, %v605
    %608 = vrot.lane.b32.xlu0 %v606, 120
    %v609 = vpop.permute.xlu0 %608
    %v611 = vadd.f32 %v601, %v609
    %612 = vrot.lane.b32.xlu0 %v588, 12
    %v613 = vpop.permute.xlu0 %612
    %v615 = vsub.f32 %v572, %v613
    %v616 = vmul.f32 %v615, %v615
    %618 = vrot.lane.b32.xlu0 %v616, 116
    %v619 = vpop.permute.xlu0 %618
    %v621 = vadd.f32 %v611, %v619
    %v622 = vmul.f32 %v621, 0.33333334
    %vm623 = vcmask 25600
    %624 = vst.msk [vmem:[#allocation2] sm:$0x3] %vm623, %v588
    %v625 = vadd.f32 %v622, 1e-05
    %v626 = vrsqrt.pop %v625
    %v627 = vmul.f32 %v625, %v626
    %vm628 = vcmp.eq.f32.partialorder %v625, inf
    %v629 = vsel %vm628, %v625, %v627
    %vm630 = vcmp.eq.f32.partialorder %v625, 0.0
    %v631 = vand.u32 %v625, 2147483648
    %v632 = vsel %vm630, %v631, %v629
    %633 = vst.msk [vmem:[#allocation4] sm:$0x3] %vm623, %v632
    // Predicated region
    $region14: #{tpu_custom_call.1} parent=1 // pred_check
      _
    $region15: #{tpu_custom_call.1} parent=1 // pred_check_branch
      %635 = sbr.rel (0) target = $region17
    $region16: #{tpu_custom_call.1} parent=1 // pred_region
      %s637 = ssub.s32 32, 32
      %638 = vsyncadd [#allocation3], %s637
      %s640 = sshll.u32 [#allocation2], 4
      %s641 = int_to_ptr.vmem [resolvable:$true] %s640
      %643 = dma.vmem_to_hbm [thread:$0]  %s641, 32, %s3, [#allocation3]
    $region17: #{tpu_custom_call.1} parent=1 // pred_fallthru
      _
    // Predicated region
    $region18: #{tpu_custom_call.1} parent=1 // pred_check
      _
    $region19: #{tpu_custom_call.1} parent=1 // pred_check_branch
      %645 = sbr.rel (0) target = $region21
    $region20: #{tpu_custom_call.1} parent=1 // pred_region
      %s647 = ssub.s32 32, 32
      %648 = vsyncadd [#allocation5], %s647
      %s650 = sshll.u32 [#allocation4], 4
      %s651 = int_to_ptr.vmem [resolvable:$true] %s650
      %653 = dma.vmem_to_hbm [thread:$0]  %s651, 32, %s4, [#allocation5]
    $region21: #{tpu_custom_call.1} parent=1 // pred_fallthru
      _
    // Predicated region
    $region22: #{tpu_custom_call.1} parent=1 // pred_check
      _
    $region23: #{tpu_custom_call.1} parent=1 // pred_check_branch
      %655 = sbr.rel (0) target = $region25
    $region24: #{tpu_custom_call.1} parent=1 // pred_region
      %656 = dma.done [#allocation3], 32
    $region25: #{tpu_custom_call.1} parent=1 // pred_fallthru
      _
    // Predicated region
    $region26: #{tpu_custom_call.1} parent=1 // pred_check
      _
    $region27: #{tpu_custom_call.1} parent=1 // pred_check_branch
      %658 = sbr.rel (0) target = $region29
    $region28: #{tpu_custom_call.1} parent=1 // pred_region
      %659 = dma.done [#allocation5], 32
    $region29: #{tpu_custom_call.1} parent=1 // pred_fallthru
      _
    %660 = vsyncpa [#allocation3], 1
    %661 = vsyncpa [#allocation5], 1

</llo_original>
